<compile_context>
chip_gen: v6e
topology: v6e:2x2x1
jax: 0.10.0
libtpu: 0.0.40
codegen_flags: <defaults>
</compile_context>

<pallas_src>
import functools
import math

import jax
import jax.numpy as jnp
from jax import lax
from jax.experimental import pallas as pl
from jax.experimental.pallas import tpu as pltpu


# ---------------------------------------------------------------------------
# Pallas kernel
# ---------------------------------------------------------------------------
def _noisy_linear_kernel(x_ref, xs_ref, wmu_ref, wsig_ref, eps_out_ref,
                         beff_ref, o_ref, acc_ref):
    k = pl.program_id(1)

    @pl.when(k == 0)
    def _():
        acc_ref[...] = jnp.zeros_like(acc_ref)

    # mu part:    x (B, tk)         . Wmu   (tn, tk)  contracted on K
    # sigma part: (x*eps_in) (B,tk) . Wsig  (tn, tk)  contracted on K
    # Both go straight to the MXU (bf16 in, f32 out); no weight temporary.
    mu_part = lax.dot_general(
        x_ref[...], wmu_ref[...],
        dimension_numbers=(((1,), (1,)), ((), ())),
        preferred_element_type=jnp.float32)
    sig_part = lax.dot_general(
        xs_ref[...], wsig_ref[...],
        dimension_numbers=(((1,), (1,)), ((), ())),
        preferred_element_type=jnp.float32)

    # eps_out is a (1, tn) row -> cheap sublane broadcast against (B, tn).
    acc_ref[...] += mu_part + eps_out_ref[...] * sig_part

    @pl.when(k == pl.num_programs(1) - 1)
    def _():
        o_ref[...] = (acc_ref[...] + beff_ref[...]).astype(o_ref.dtype)


# ---------------------------------------------------------------------------
# Wrapper
# ---------------------------------------------------------------------------
def _round_up(v, m):
    return ((v + m - 1) // m) * m


def _largest_tile(total, cap, lane=128):
    """Largest multiple of `lane` that divides `total` (a multiple of lane) and is <= cap."""
    cap = max(lane, min(cap, total))
    t = (cap // lane) * lane
    while total % t != 0:
        t -= lane
    return t


@functools.partial(jax.jit, static_argnames=("tile_n", "tile_k",
                                             "vmem_limit_bytes",
                                             "weights_dtype"))
def noisy_linear_forward(x, weight_mu, weight_sigma, eps_in, eps_out,
                         bias_mu, bias_sigma, bias_epsilon,
                         *, tile_n=512, tile_k=2048,
                         vmem_limit_bytes=48 * 1024 * 1024,
                         weights_dtype=jnp.bfloat16):
    """x: (B, in_features) -> (B, out_features).

    eps_in / eps_out are the factor vectors of the factorized noise:
      weight_epsilon == outer(eps_out, eps_in),  bias_epsilon == eps_out
    (any noise `strength` is assumed folded into eps_out / bias_epsilon).
    """
    batch, in_features = x.shape
    out_features = weight_mu.shape[0]
    out_dtype = x.dtype

    # --- lane-dense padding (keeps output stores unmasked) -----------------
    k_pad = _round_up(in_features, 128)
    n_pad = _round_up(out_features, 128)

    # --- pre-compute O(B*K) / O(N) quantities in f32, cast streams to bf16 --
    xf = x.astype(jnp.float32)
    x_scaled = xf * eps_in.astype(jnp.float32)[None, :]          # (B, K)
    b_eff = (bias_mu + bias_sigma * bias_epsilon).astype(jnp.float32)  # (N,)
    eps_out_f = eps_out.astype(jnp.float32)                      # (N,)

    x_bf = xf.astype(weights_dtype)
    xs_bf = x_scaled.astype(weights_dtype)
    wmu = weight_mu.astype(weights_dtype)
    wsig = weight_sigma.astype(weights_dtype)

    if k_pad != in_features:
        dk = k_pad - in_features
        x_bf = jnp.pad(x_bf, ((0, 0), (0, dk)))
        xs_bf = jnp.pad(xs_bf, ((0, 0), (0, dk)))
        wmu = jnp.pad(wmu, ((0, 0), (0, dk)))
        wsig = jnp.pad(wsig, ((0, 0), (0, dk)))
    if n_pad != out_features:
        dn = n_pad - out_features
        wmu = jnp.pad(wmu, ((0, dn), (0, 0)))
        wsig = jnp.pad(wsig, ((0, dn), (0, 0)))
        b_eff = jnp.pad(b_eff, (0, dn))
        eps_out_f = jnp.pad(eps_out_f, (0, dn))

    eps_out_row = eps_out_f.reshape(1, n_pad)
    b_eff_row = b_eff.reshape(1, n_pad)

    # --- tile selection -----------------------------------------------------
    tn = _largest_tile(n_pad, tile_n)
    if n_pad // tn < 2 and n_pad >= 256:
        # Keep grid[0] >= 2 so both v7x TensorCores get a shard of N.
        tn = _largest_tile(n_pad, n_pad // 2)
    tk = _largest_tile(k_pad, tile_k)
    grid = (n_pad // tn, k_pad // tk)

    dt_bytes = jnp.dtype(weights_dtype).itemsize
    cost = pl.CostEstimate(
        flops=4 * batch * n_pad * k_pad,          # two matmuls
        transcendentals=0,
        bytes_accessed=(2 * n_pad * k_pad * dt_bytes      # weight streams
                        + 2 * batch * k_pad * dt_bytes    # x, x*eps_in
                        + batch * n_pad * jnp.dtype(out_dtype).itemsize))

    out = pl.pallas_call(
        _noisy_linear_kernel,
        out_shape=jax.ShapeDtypeStruct((batch, n_pad), out_dtype),
        grid_spec=pltpu.PrefetchScalarGridSpec(
            num_scalar_prefetch=0,
            grid=grid,
            in_specs=[
                pl.BlockSpec((batch, tk), lambda i, k: (0, k)),   # x
                pl.BlockSpec((batch, tk), lambda i, k: (0, k)),   # x * eps_in
                pl.BlockSpec((tn, tk), lambda i, k: (i, k)),      # weight_mu
                pl.BlockSpec((tn, tk), lambda i, k: (i, k)),      # weight_sigma
                pl.BlockSpec((1, tn), lambda i, k: (0, i)),       # eps_out row
                pl.BlockSpec((1, tn), lambda i, k: (0, i)),       # effective bias
            ],
            out_specs=pl.BlockSpec((batch, tn), lambda i, k: (0, i)),
            scratch_shapes=[pltpu.VMEM((batch, tn), jnp.float32)],
        ),
        compiler_params=pltpu.CompilerParams(
            dimension_semantics=("parallel", "arbitrary"),
            vmem_limit_bytes=vmem_limit_bytes),
        cost_estimate=cost,
    )(x_bf, xs_bf, wmu, wsig, eps_out_row, b_eff_row)

    if n_pad != out_features:
        out = out[:, :out_features]
    return out


# ---------------------------------------------------------------------------
# Deterministic parameter / noise initialization (mirrors the PyTorch module)
# ---------------------------------------------------------------------------
def scale_noise(key, size):
    """Factorized gaussian noise: sign(x) * sqrt(|x|)."""
    x = jax.random.normal(key, (size,), dtype=jnp.float32)
    return jnp.sign(x) * jnp.sqrt(jnp.abs(x))


def init_noisy_linear(key, in_features, out_features, std_init=0.5, strength=1.0):
    k_wmu, k_bmu, k_eps_in, k_eps_out = jax.random.split(key, 4)
    mu_range = 1.0 / math.sqrt(in_features)

    weight_mu = jax.random.uniform(
        k_wmu, (out_features, in_features), jnp.float32,
        minval=-mu_range, maxval=mu_range)
    weight_sigma = jnp.full((out_features, in_features),
                            std_init / math.sqrt(in_features), jnp.float32)
    bias_mu = jax.random.uniform(
        k_bmu, (out_features,), jnp.float32, minval=-mu_range, maxval=mu_range)
    bias_sigma = jnp.full((out_features,),
                          std_init / math.sqrt(out_features), jnp.float32)

    eps_in = scale_noise(k_eps_in, in_features)
    eps_out = strength * scale_noise(k_eps_out, out_features)   # strength folded in
    bias_epsilon = eps_out                                       # == strength * eps_out

    return dict(weight_mu=weight_mu, weight_sigma=weight_sigma,
                eps_in=eps_in, eps_out=eps_out,
                bias_mu=bias_mu, bias_sigma=bias_sigma,
                bias_epsilon=bias_epsilon)


# ---------------------------------------------------------------------------
# Main
# ---------------------------------------------------------------------------
if __name__ == "__main__":
    key = jax.random.PRNGKey(0)
    k_params, k_x = jax.random.split(key)

    # Small but lane-dense shapes (out/in multiples of 128).
    batch, in_features, out_features = 8, 512, 256
    params = init_noisy_linear(k_params, in_features, out_features, std_init=0.5)
    x = jax.random.normal(k_x, (batch, in_features), dtype=jnp.float32)

    out = noisy_linear_forward(
        x,
        params["weight_mu"], params["weight_sigma"],
        params["eps_in"], params["eps_out"],
        params["bias_mu"], params["bias_sigma"], params["bias_epsilon"],
    )
    out = jax.block_until_ready(out)

    # Reference in plain f32 JAX: same math as F.linear with dense weight_epsilon.
    w_eps = jnp.outer(params["eps_out"], params["eps_in"])
    w_eff = params["weight_mu"] + params["weight_sigma"] * w_eps
    b_eff = params["bias_mu"] + params["bias_sigma"] * params["bias_epsilon"]
    ref = lax.dot_general(
        x, w_eff, dimension_numbers=(((1,), (1,)), ((), ())),
        precision=lax.Precision.HIGHEST,
        preferred_element_type=jnp.float32) + b_eff

    assert out.shape == (batch, out_features)
    # Tolerance accounts for the bf16 weight/activation streams (f32 accumulation).
    assert jnp.allclose(out, ref, atol=2e-2, rtol=2e-2), "mismatch vs reference"

    print("KERNEL_OK")
</pallas_src>

<mosaic_0001>
module attributes {stable_mosaic.version = 11 : i64} {
  func.func @_noisy_linear_kernel(%arg0: i32, %arg1: i32, %arg2: memref<8x512xbf16, #tpu.memory_space<vmem>>, %arg3: memref<8x512xbf16, #tpu.memory_space<vmem>>, %arg4: memref<128x512xbf16, #tpu.memory_space<vmem>>, %arg5: memref<128x512xbf16, #tpu.memory_space<vmem>>, %arg6: memref<1x128xf32, #tpu.memory_space<vmem>>, %arg7: memref<1x128xf32, #tpu.memory_space<vmem>>, %arg8: memref<8x128xf32, #tpu.memory_space<vmem>>, %arg9: memref<8x128xf32, #tpu.memory_space<vmem>>) attributes {dimension_semantics = [#tpu.dimension_semantics<parallel>, #tpu.dimension_semantics<arbitrary>], iteration_bounds = array<i64: 2, 1>, scalar_prefetch = 0 : i64, scratch_operands = 1 : i64, tpu.core_type = #tpu.core_type<tc>, window_params = [{transform_indices = @transform_0, window_bounds = array<i64: 8, 512>}, {transform_indices = @transform_1, window_bounds = array<i64: 8, 512>}, {transform_indices = @transform_2, window_bounds = array<i64: 128, 512>}, {transform_indices = @transform_3, window_bounds = array<i64: 128, 512>}, {transform_indices = @transform_4, window_bounds = array<i64: 1, 128>}, {transform_indices = @transform_5, window_bounds = array<i64: 1, 128>}, {transform_indices = @transform_6, window_bounds = array<i64: 8, 128>}]} {
    %c0_i32 = arith.constant 0 : i32
    %0 = arith.cmpi eq, %arg1, %c0_i32 : i32
    %1 = arith.extui %0 : i1 to i32
    %c0_i32_0 = arith.constant 0 : i32
    %2 = arith.cmpi ne, %1, %c0_i32_0 : i32
    scf.if %2 {
      %cst_17 = arith.constant 0.000000e+00 : f32
      %19 = vector.broadcast %cst_17 : f32 to vector<8x128xf32>
      %c0_18 = arith.constant 0 : index
      %c0_19 = arith.constant 0 : index
      %20 = vector.load %arg9[%c0_18, %c0_19] : memref<8x128xf32, #tpu.memory_space<vmem>>, vector<8x128xf32>
      tpu.vector_store %arg9[%c0_18, %c0_19], %19 {strides = array<i32>} : memref<8x128xf32, #tpu.memory_space<vmem>>, vector<8x128xf32>,
    } else {
    }
    %c0 = arith.constant 0 : index
    %c0_1 = arith.constant 0 : index
    %3 = vector.load %arg2[%c0, %c0_1] : memref<8x512xbf16, #tpu.memory_space<vmem>>, vector<8x512xbf16>
    %c0_2 = arith.constant 0 : index
    %c0_3 = arith.constant 0 : index
    %4 = vector.load %arg4[%c0_2, %c0_3] : memref<128x512xbf16, #tpu.memory_space<vmem>>, vector<128x512xbf16>
    %cst = arith.constant dense<0.000000e+00> : vector<8x128xf32>
    %5 = tpu.matmul %3, %4, %cst {dimension_numbers = #tpu.dot_dimension_numbers<[1], [1], [0], [0], [0, 0, 1, 0], [], []>} : vector<8x512xbf16>, vector<128x512xbf16>, vector<8x128xf32> -> vector<8x128xf32>
    %c0_4 = arith.constant 0 : index
    %c0_5 = arith.constant 0 : index
    %6 = vector.load %arg3[%c0_4, %c0_5] : memref<8x512xbf16, #tpu.memory_space<vmem>>, vector<8x512xbf16>
    %c0_6 = arith.constant 0 : index
    %c0_7 = arith.constant 0 : index
    %7 = vector.load %arg5[%c0_6, %c0_7] : memref<128x512xbf16, #tpu.memory_space<vmem>>, vector<128x512xbf16>
    %cst_8 = arith.constant dense<0.000000e+00> : vector<8x128xf32>
    %8 = tpu.matmul %6, %7, %cst_8 {dimension_numbers = #tpu.dot_dimension_numbers<[1], [1], [0], [0], [0, 0, 1, 0], [], []>} : vector<8x512xbf16>, vector<128x512xbf16>, vector<8x128xf32> -> vector<8x128xf32>
    %c0_9 = arith.constant 0 : index
    %c0_10 = arith.constant 0 : index
    %9 = vector.load %arg9[%c0_9, %c0_10] : memref<8x128xf32, #tpu.memory_space<vmem>>, vector<8x128xf32>
    %c0_11 = arith.constant 0 : index
    %c0_12 = arith.constant 0 : index
    %10 = vector.load %arg6[%c0_11, %c0_12] : memref<1x128xf32, #tpu.memory_space<vmem>>, vector<1x128xf32>
    %11 = vector.broadcast %10 : vector<1x128xf32> to vector<8x128xf32>
    %12 = arith.mulf %11, %8 : vector<8x128xf32>
    %13 = arith.addf %5, %12 : vector<8x128xf32>
    %14 = arith.addf %9, %13 : vector<8x128xf32>
    %c0_13 = arith.constant 0 : index
    %c0_14 = arith.constant 0 : index
    %15 = vector.load %arg9[%c0_13, %c0_14] : memref<8x128xf32, #tpu.memory_space<vmem>>, vector<8x128xf32>
    tpu.vector_store %arg9[%c0_13, %c0_14], %14 {strides = array<i32>} : memref<8x128xf32, #tpu.memory_space<vmem>>, vector<8x128xf32>,
    %c0_i32_15 = arith.constant 0 : i32
    %16 = arith.cmpi eq, %arg1, %c0_i32_15 : i32
    %17 = arith.extui %16 : i1 to i32
    %c0_i32_16 = arith.constant 0 : i32
    %18 = arith.cmpi ne, %17, %c0_i32_16 : i32
    scf.if %18 {
      %c0_17 = arith.constant 0 : index
      %c0_18 = arith.constant 0 : index
      %19 = vector.load %arg9[%c0_17, %c0_18] : memref<8x128xf32, #tpu.memory_space<vmem>>, vector<8x128xf32>
      %c0_19 = arith.constant 0 : index
      %c0_20 = arith.constant 0 : index
      %20 = vector.load %arg7[%c0_19, %c0_20] : memref<1x128xf32, #tpu.memory_space<vmem>>, vector<1x128xf32>
      %21 = vector.broadcast %20 : vector<1x128xf32> to vector<8x128xf32>
      %22 = arith.addf %19, %21 : vector<8x128xf32>
      %c0_21 = arith.constant 0 : index
      %c0_22 = arith.constant 0 : index
      %23 = vector.load %arg8[%c0_21, %c0_22] : memref<8x128xf32, #tpu.memory_space<vmem>>, vector<8x128xf32>
      tpu.vector_store %arg8[%c0_21, %c0_22], %22 {strides = array<i32>} : memref<8x128xf32, #tpu.memory_space<vmem>>, vector<8x128xf32>,
    } else {
    }
    return
  }
  func.func @transform_0(%arg0: i32, %arg1: i32) -> (i32, i32) {
    %c0_i32 = arith.constant 0 : i32
    %c0_i32_0 = arith.constant 0 : i32
    return %c0_i32, %arg1 : i32, i32
  }
  func.func @transform_1(%arg0: i32, %arg1: i32) -> (i32, i32) {
    %c0_i32 = arith.constant 0 : i32
    %c0_i32_0 = arith.constant 0 : i32
    return %c0_i32, %arg1 : i32, i32
  }
  func.func @transform_2(%arg0: i32, %arg1: i32) -> (i32, i32) {
    %c0_i32 = arith.constant 0 : i32
    return %arg0, %arg1 : i32, i32
  }
  func.func @transform_3(%arg0: i32, %arg1: i32) -> (i32, i32) {
    %c0_i32 = arith.constant 0 : i32
    return %arg0, %arg1 : i32, i32
  }
  func.func @transform_4(%arg0: i32, %arg1: i32) -> (i32, i32) {
    %c0_i32 = arith.constant 0 : i32
    %c0_i32_0 = arith.constant 0 : i32
    return %c0_i32, %arg0 : i32, i32
  }
  func.func @transform_5(%arg0: i32, %arg1: i32) -> (i32, i32) {
    %c0_i32 = arith.constant 0 : i32
    %c0_i32_0 = arith.constant 0 : i32
    return %c0_i32, %arg0 : i32, i32
  }
  func.func @transform_6(%arg0: i32, %arg1: i32) -> (i32, i32) {
    %c0_i32 = arith.constant 0 : i32
    %c0_i32_0 = arith.constant 0 : i32
    return %c0_i32, %arg0 : i32, i32
  }
}

</mosaic_0001>

<llo_original>
// kernel: noisy_linear_forward.1
$region0: #{noisy_linear_forward.1}
  #allocation0 [shape = 'u32[]', space=smem, size = 0x4, offset = 0x4, fixed_abs, tag = 'smem constant byte address 0x4 - core index']
  #allocation1 [shape = 'u32[144,128]{1,0:T(1,128)}', space=vmem, size = 0x12000, scoped, tag = 'internal scratch']
  #allocation2 [shape = 'f32[8,128]{1,0:T(8,128)}', space=vmem, size = 0x1000, scoped, tag = 'scratch operand']
  %s0 = inlined_call_operand.vmem [shape: bf16[8,512], index: 0, kind: input, shape index: {}]
  %s1 = inlined_call_operand.vmem [shape: bf16[8,512], index: 1, kind: input, shape index: {}]
  %s2 = inlined_call_operand.vmem [shape: bf16[256,512], index: 2, kind: input, shape index: {}]
  %s3 = inlined_call_operand.vmem [shape: bf16[256,512], index: 3, kind: input, shape index: {}]
  %s4 = inlined_call_operand.vmem [shape: f32[1,256], index: 4, kind: input, shape index: {}]
  %s5 = inlined_call_operand.vmem [shape: f32[1,256], index: 5, kind: input, shape index: {}]
  %s6 = inlined_call_operand.hbm [shape: f32[8,256], index: 6, kind: output, shape index: {}]
  %s7 = sld [smem:[#allocation0]]
  $region65: #{noisy_linear_forward.1} parent=0
    _
  %s9 = ssub.s32 1, %s7
  %s10 = scalar_select 0, %s9, %s7
  $region1: #{noisy_linear_forward.1} parent=0
    #allocation3 [shape = 'u8[8192]{0}', space=vmem, size = 0x2000, scoped, tag = 'output window, operand 0']
    #allocation4 [shape = 's32[2]{0}', space=sflag, size = 0x8, scoped, tag = 'scoped memory for noisy_linear_forward.1']
    %11 = vsyncpa [#allocation4], 0
    %s12 = scalar_lea.sflag [#allocation4], 1
    %13 = vsyncpa %s12, 0
    loop: start=0, step=1, limit=4
    $region2: #{noisy_linear_forward.1} parent=1 // loop_pre_header
      _
    $region3: #{noisy_linear_forward.1} parent=1 // loop_header
      %s15 = sphi 0, %s19
      %p16 = scmp.ge.s32.totalorder %s15, 4
      %s22 = sphi 0, %s34
      %s23 = sphi 0, %s30
      %s24 = sphi 0, %s22
      %s25 = sphi 0, %s23
      %s26 = sphi 0, %s24
      %s27 = sphi 0, %s25
      %s37 = sphi 0, %s39
      %s40 = sphi 0, %s37
      %s41 = sphi 0, %s40
      %s57 = sphi 0, %s41
      %s63 = sphi 0, %s65
      %s66 = sphi 0, %s63
      %s67 = sphi 0, %s66
      %s83 = sphi 0, %s67
      %s91 = sphi 0, %s93
      %s94 = sphi 0, %s91
      %s95 = sphi 0, %s94
      %s111 = sphi 0, %s95
      %s119 = sphi 0, %s121
      %s122 = sphi 0, %s119
      %s123 = sphi 0, %s122
      %s139 = sphi 0, %s123
      %s145 = sphi 0, %s147
      %s148 = sphi 0, %s145
      %s149 = sphi 0, %s148
      %s165 = sphi 0, %s149
      %s171 = sphi 0, %s173
      %s174 = sphi 0, %s171
      %s175 = sphi 0, %s174
      %s191 = sphi 0, %s175
      %s197 = sphi 0, %s199
      %s200 = sphi 0, %s197
      %s201 = sphi 0, %s200
      %s217 = sphi 0, %s201
    $region4: #{noisy_linear_forward.1} parent=1 // loop_header_branch
      %18 = sbr.rel (%p16) target = $region8
    $region5: #{noisy_linear_forward.1} parent=1 // loop_body
      %s20 = ssub.s32 %s15, 1
      %s21 = ssub.s32 %s15, 2
      %s28 = sadd.s32 1, %s23
      %p29 = scmp.ge.s32.totalorder %s28, 1
      %s30 = scalar_select %p29, 0, %s28
      %s31 = sadd.s32 1, %s22
      %s32 = scalar_select %p29, %s31, %s22
      %p33 = scmp.ge.s32.totalorder %s32, 2
      %s34 = scalar_select %p33, 0, %s32
      %s35 = ssub.s32 %s23, %s30
      %p36 = scmp.eq.s32.totalorder %s35, 0
      %s38 = sadd.s32 %s37, 1
      %s39 = scalar_select %p36, %s37, %s38
      %p42 = pneg %p36
      %p43 = scmp.eq.s32.totalorder %s15, 1
      %p44 = por %p42, %p43
      %p45 = scmp.ne.s32.totalorder %s37, %s40
      %p46 = scmp.eq.s32.totalorder %s15, 0
      %p47 = por %p45, %p46
      %p48 = scmp.ne.s32.totalorder %s37, %s40
      %p49 = scmp.eq.s32.totalorder %s20, 1
      %p50 = por %p48, %p49
      %p51 = scmp.ne.s32.totalorder %s40, %s41
      %p52 = scmp.eq.s32.totalorder %s20, 0
      %p53 = por %p51, %p52
      %p54 = scmp.ne.s32.totalorder %s40, %s41
      %p55 = scmp.eq.s32.totalorder %s21, 1
      %p56 = por %p54, %p55
      %p58 = scmp.ne.s32.totalorder %s41, %s57
      %p59 = scmp.eq.s32.totalorder %s21, 0
      %p60 = por %p58, %p59
      %s61 = ssub.s32 %s23, %s30
      %p62 = scmp.eq.s32.totalorder %s61, 0
      %s64 = sadd.s32 %s63, 1
      %s65 = scalar_select %p62, %s63, %s64
      %p68 = pneg %p62
      %p69 = scmp.eq.s32.totalorder %s15, 1
      %p70 = por %p68, %p69
      %p71 = scmp.ne.s32.totalorder %s63, %s66
      %p72 = scmp.eq.s32.totalorder %s15, 0
      %p73 = por %p71, %p72
      %p74 = scmp.ne.s32.totalorder %s63, %s66
      %p75 = scmp.eq.s32.totalorder %s20, 1
      %p76 = por %p74, %p75
      %p77 = scmp.ne.s32.totalorder %s66, %s67
      %p78 = scmp.eq.s32.totalorder %s20, 0
      %p79 = por %p77, %p78
      %p80 = scmp.ne.s32.totalorder %s66, %s67
      %p81 = scmp.eq.s32.totalorder %s21, 1
      %p82 = por %p80, %p81
      %p84 = scmp.ne.s32.totalorder %s67, %s83
      %p85 = scmp.eq.s32.totalorder %s21, 0
      %p86 = por %p84, %p85
      %s87 = ssub.s32 %s22, %s34
      %s88 = ssub.s32 %s23, %s30
      %s89 = sor.u32 %s87, %s88
      %p90 = scmp.eq.s32.totalorder %s89, 0
      %s92 = sadd.s32 %s91, 1
      %s93 = scalar_select %p90, %s91, %s92
      %p96 = pneg %p90
      %p97 = scmp.eq.s32.totalorder %s15, 1
      %p98 = por %p96, %p97
      %p99 = scmp.ne.s32.totalorder %s91, %s94
      %p100 = scmp.eq.s32.totalorder %s15, 0
      %p101 = por %p99, %p100
      %p102 = scmp.ne.s32.totalorder %s91, %s94
      %p103 = scmp.eq.s32.totalorder %s20, 1
      %p104 = por %p102, %p103
      %p105 = scmp.ne.s32.totalorder %s94, %s95
      %p106 = scmp.eq.s32.totalorder %s20, 0
      %p107 = por %p105, %p106
      %p108 = scmp.ne.s32.totalorder %s94, %s95
      %p109 = scmp.eq.s32.totalorder %s21, 1
      %p110 = por %p108, %p109
      %p112 = scmp.ne.s32.totalorder %s95, %s111
      %p113 = scmp.eq.s32.totalorder %s21, 0
      %p114 = por %p112, %p113
      %s115 = ssub.s32 %s22, %s34
      %s116 = ssub.s32 %s23, %s30
      %s117 = sor.u32 %s115, %s116
      %p118 = scmp.eq.s32.totalorder %s117, 0
      %s120 = sadd.s32 %s119, 1
      %s121 = scalar_select %p118, %s119, %s120
      %p124 = pneg %p118
      %p125 = scmp.eq.s32.totalorder %s15, 1
      %p126 = por %p124, %p125
      %p127 = scmp.ne.s32.totalorder %s119, %s122
      %p128 = scmp.eq.s32.totalorder %s15, 0
      %p129 = por %p127, %p128
      %p130 = scmp.ne.s32.totalorder %s119, %s122
      %p131 = scmp.eq.s32.totalorder %s20, 1
      %p132 = por %p130, %p131
      %p133 = scmp.ne.s32.totalorder %s122, %s123
      %p134 = scmp.eq.s32.totalorder %s20, 0
      %p135 = por %p133, %p134
      %p136 = scmp.ne.s32.totalorder %s122, %s123
      %p137 = scmp.eq.s32.totalorder %s21, 1
      %p138 = por %p136, %p137
      %p140 = scmp.ne.s32.totalorder %s123, %s139
      %p141 = scmp.eq.s32.totalorder %s21, 0
      %p142 = por %p140, %p141
      %s143 = ssub.s32 %s22, %s34
      %p144 = scmp.eq.s32.totalorder %s143, 0
      %s146 = sadd.s32 %s145, 1
      %s147 = scalar_select %p144, %s145, %s146
      %p150 = pneg %p144
      %p151 = scmp.eq.s32.totalorder %s15, 1
      %p152 = por %p150, %p151
      %p153 = scmp.ne.s32.totalorder %s145, %s148
      %p154 = scmp.eq.s32.totalorder %s15, 0
      %p155 = por %p153, %p154
      %p156 = scmp.ne.s32.totalorder %s145, %s148
      %p157 = scmp.eq.s32.totalorder %s20, 1
      %p158 = por %p156, %p157
      %p159 = scmp.ne.s32.totalorder %s148, %s149
      %p160 = scmp.eq.s32.totalorder %s20, 0
      %p161 = por %p159, %p160
      %p162 = scmp.ne.s32.totalorder %s148, %s149
      %p163 = scmp.eq.s32.totalorder %s21, 1
      %p164 = por %p162, %p163
      %p166 = scmp.ne.s32.totalorder %s149, %s165
      %p167 = scmp.eq.s32.totalorder %s21, 0
      %p168 = por %p166, %p167
      %s169 = ssub.s32 %s22, %s34
      %p170 = scmp.eq.s32.totalorder %s169, 0
      %s172 = sadd.s32 %s171, 1
      %s173 = scalar_select %p170, %s171, %s172
      %p176 = pneg %p170
      %p177 = scmp.eq.s32.totalorder %s15, 1
      %p178 = por %p176, %p177
      %p179 = scmp.ne.s32.totalorder %s171, %s174
      %p180 = scmp.eq.s32.totalorder %s15, 0
      %p181 = por %p179, %p180
      %p182 = scmp.ne.s32.totalorder %s171, %s174
      %p183 = scmp.eq.s32.totalorder %s20, 1
      %p184 = por %p182, %p183
      %p185 = scmp.ne.s32.totalorder %s174, %s175
      %p186 = scmp.eq.s32.totalorder %s20, 0
      %p187 = por %p185, %p186
      %p188 = scmp.ne.s32.totalorder %s174, %s175
      %p189 = scmp.eq.s32.totalorder %s21, 1
      %p190 = por %p188, %p189
      %p192 = scmp.ne.s32.totalorder %s175, %s191
      %p193 = scmp.eq.s32.totalorder %s21, 0
      %p194 = por %p192, %p193
      %s195 = ssub.s32 %s22, %s34
      %p196 = scmp.eq.s32.totalorder %s195, 0
      %s198 = sadd.s32 %s197, 1
      %s199 = scalar_select %p196, %s197, %s198
      %p202 = pneg %p196
      %p203 = scmp.eq.s32.totalorder %s15, 1
      %p204 = por %p202, %p203
      %p205 = scmp.ne.s32.totalorder %s197, %s200
      %p206 = scmp.eq.s32.totalorder %s15, 0
      %p207 = por %p205, %p206
      %p208 = scmp.ne.s32.totalorder %s197, %s200
      %p209 = scmp.eq.s32.totalorder %s20, 1
      %p210 = por %p208, %p209
      %p211 = scmp.ne.s32.totalorder %s200, %s201
      %p212 = scmp.eq.s32.totalorder %s20, 0
      %p213 = por %p211, %p212
      %p214 = scmp.ne.s32.totalorder %s200, %s201
      %p215 = scmp.eq.s32.totalorder %s21, 1
      %p216 = por %p214, %p215
      %p218 = scmp.ne.s32.totalorder %s201, %s217
      %p219 = scmp.eq.s32.totalorder %s21, 0
      %p220 = por %p218, %p219
      %p221 = scmp.le.s32.totalorder 1, %s15
      %p222 = scmp.lt.s32.totalorder %s15, 3
      %p223 = pnand %p221, %p222
      %p224 = pneg %p223
      // Predicated region
      $region9: #{noisy_linear_forward.1} parent=5 // pred_check
        _
      $region10: #{noisy_linear_forward.1} parent=5 // pred_check_branch
        %226 = sbr.rel (%p223) target = $region12
      $region11: #{noisy_linear_forward.1} parent=5 // pred_region
        %s227 = ssub.s32 %s15, 1
        // Predicated region
        $region13: #{noisy_linear_forward.1} parent=11 // pred_check
          %p228 = pneg %p53
        $region14: #{noisy_linear_forward.1} parent=11 // pred_check_branch
          %230 = sbr.rel (%p228) target = $region16
        $region15: #{noisy_linear_forward.1} parent=11 // pred_region
          %s231 = smul.u32 4, %s25
          %p232 = scmp.lt.s32.totalorder %s231, 3
          %s233 = scalar_select %p232, %s231, 3
          %s234 = smul.addr %s233, 4
          %s235 = scalar_lea.vmem %s0, %s234
          %s236 = smul.u32 4, %s25
        $region16: #{noisy_linear_forward.1} parent=11 // pred_fallthru
          _
        // Predicated region
        $region17: #{noisy_linear_forward.1} parent=11 // pred_check
          %p237 = pneg %p79
        $region18: #{noisy_linear_forward.1} parent=11 // pred_check_branch
          %239 = sbr.rel (%p237) target = $region20
        $region19: #{noisy_linear_forward.1} parent=11 // pred_region
          %s240 = smul.u32 4, %s25
          %p241 = scmp.lt.s32.totalorder %s240, 3
          %s242 = scalar_select %p241, %s240, 3
          %s243 = smul.addr %s242, 4
          %s244 = scalar_lea.vmem %s1, %s243
          %s245 = smul.u32 4, %s25
        $region20: #{noisy_linear_forward.1} parent=11 // pred_fallthru
          _
      $region12: #{noisy_linear_forward.1} parent=5 // pred_fallthru
        _
      %p246 = scmp.lt.s32.totalorder %s15, 2
      // Predicated region
      $region21: #{noisy_linear_forward.1} parent=5 // pred_check
        %p247 = pneg %p246
      $region22: #{noisy_linear_forward.1} parent=5 // pred_check_branch
        %249 = sbr.rel (%p247) target = $region24
      $region23: #{noisy_linear_forward.1} parent=5 // pred_region
        // Predicated region
        $region25: #{noisy_linear_forward.1} parent=23 // pred_check
          %p250 = pneg %p101
        $region26: #{noisy_linear_forward.1} parent=23 // pred_check_branch
          %252 = sbr.rel (%p250) target = $region28
        $region27: #{noisy_linear_forward.1} parent=23 // pred_region
          %s253 = smul.u32 16, %s22
          %s254 = smul.u32 4, %s23
          %p255 = scmp.lt.s32.totalorder %s253, 31
          %s256 = scalar_select %p255, %s253, 31
          %p257 = scmp.lt.s32.totalorder %s254, 3
          %s258 = scalar_select %p257, %s254, 3
          %s259 = smul.addr %s256, 4
          %s260 = sadd.s32 %s258, %s259
          %s261 = smul.addr %s260, 4
          %s262 = scalar_lea.vmem %s2, %s261
          %s263 = smul.u32 16, %s22
          %s264 = smul.u32 4, %s23
        $region28: #{noisy_linear_forward.1} parent=23 // pred_fallthru
          _
        // Predicated region
        $region29: #{noisy_linear_forward.1} parent=23 // pred_check
          %p265 = pneg %p129
        $region30: #{noisy_linear_forward.1} parent=23 // pred_check_branch
          %267 = sbr.rel (%p265) target = $region32
        $region31: #{noisy_linear_forward.1} parent=23 // pred_region
          %s268 = smul.u32 16, %s22
          %s269 = smul.u32 4, %s23
          %p270 = scmp.lt.s32.totalorder %s268, 31
          %s271 = scalar_select %p270, %s268, 31
          %p272 = scmp.lt.s32.totalorder %s269, 3
          %s273 = scalar_select %p272, %s269, 3
          %s274 = smul.addr %s271, 4
          %s275 = sadd.s32 %s273, %s274
          %s276 = smul.addr %s275, 4
          %s277 = scalar_lea.vmem %s3, %s276
          %s278 = smul.u32 16, %s22
          %s279 = smul.u32 4, %s23
        $region32: #{noisy_linear_forward.1} parent=23 // pred_fallthru
          _
        // Predicated region
        $region33: #{noisy_linear_forward.1} parent=23 // pred_check
          %p280 = pneg %p155
        $region34: #{noisy_linear_forward.1} parent=23 // pred_check_branch
          %282 = sbr.rel (%p280) target = $region36
        $region35: #{noisy_linear_forward.1} parent=23 // pred_region
          %p283 = scmp.lt.s32.totalorder %s22, 1
          %s284 = scalar_select %p283, %s22, 1
          %s285 = scalar_lea.vmem %s4, %s284
        $region36: #{noisy_linear_forward.1} parent=23 // pred_fallthru
          _
        // Predicated region
        $region37: #{noisy_linear_forward.1} parent=23 // pred_check
          %p286 = pneg %p181
        $region38: #{noisy_linear_forward.1} parent=23 // pred_check_branch
          %288 = sbr.rel (%p286) target = $region40
        $region39: #{noisy_linear_forward.1} parent=23 // pred_region
          %p289 = scmp.lt.s32.totalorder %s22, 1
          %s290 = scalar_select %p289, %s22, 1
          %s291 = scalar_lea.vmem %s5, %s290
        $region40: #{noisy_linear_forward.1} parent=23 // pred_fallthru
          _
      $region24: #{noisy_linear_forward.1} parent=5 // pred_fallthru
        _
      %p292 = scmp.le.s32.totalorder 1, %s15
      %p293 = scmp.lt.s32.totalorder %s15, 3
      %p294 = pnand %p292, %p293
      %p295 = pneg %p294
      // Predicated region
      $region41: #{noisy_linear_forward.1} parent=5 // pred_check
        _
      $region42: #{noisy_linear_forward.1} parent=5 // pred_check_branch
        %297 = sbr.rel (%p294) target = $region44
      $region43: #{noisy_linear_forward.1} parent=5 // pred_region
        %s298 = ssub.s32 %s15, 1
        %s299 = smul.u32 4, %s25
        %p300 = scmp.lt.s32.totalorder %s299, 3
        %s301 = scalar_select %p300, %s299, 3
        %s302 = smul.addr %s301, 4
        %s303 = scalar_lea.vmem %s0, %s302
        %p304 = pneg %p53
        %p305 = pneg %p50
        %s306 = smul.u32 4, %s25
        %p307 = scmp.lt.s32.totalorder %s306, 3
        %s308 = scalar_select %p307, %s306, 3
        %s309 = smul.addr %s308, 4
        %s310 = scalar_lea.vmem %s1, %s309
        %p311 = pneg %p79
        %p312 = pneg %p76
        %s313 = smul.u32 16, %s24
        %s314 = smul.u32 4, %s25
        %p315 = scmp.lt.s32.totalorder %s313, 31
        %s316 = scalar_select %p315, %s313, 31
        %p317 = scmp.lt.s32.totalorder %s314, 3
        %s318 = scalar_select %p317, %s314, 3
        %s319 = smul.addr %s316, 4
        %s320 = sadd.s32 %s318, %s319
        %s321 = smul.addr %s320, 4
        %s322 = scalar_lea.vmem %s2, %s321
        %p323 = pneg %p107
        %p324 = pneg %p104
        %s325 = smul.u32 16, %s24
        %s326 = smul.u32 4, %s25
        %p327 = scmp.lt.s32.totalorder %s325, 31
        %s328 = scalar_select %p327, %s325, 31
        %p329 = scmp.lt.s32.totalorder %s326, 3
        %s330 = scalar_select %p329, %s326, 3
        %s331 = smul.addr %s328, 4
        %s332 = sadd.s32 %s330, %s331
        %s333 = smul.addr %s332, 4
        %s334 = scalar_lea.vmem %s3, %s333
        %p335 = pneg %p135
        %p336 = pneg %p132
        %p337 = scmp.lt.s32.totalorder %s24, 1
        %s338 = scalar_select %p337, %s24, 1
        %s339 = scalar_lea.vmem %s4, %s338
        %p340 = pneg %p161
        %p341 = pneg %p158
        %p342 = scmp.lt.s32.totalorder %s24, 1
        %s343 = scalar_select %p342, %s24, 1
        %s344 = scalar_lea.vmem %s5, %s343
        %p345 = pneg %p187
        %p346 = pneg %p184
        %p347 = pneg %p213
        %p348 = pneg %p210
        %s349 = sand.u32 %s200, 1
        %s350 = scalar_lea.sflag [#allocation4], %s349
        %s351 = sand.u32 %s200, 1
        %s352 = smul.addr %s351, 8
        %s353 = scalar_lea.vmem [#allocation3], %s352
        %s354 = smul.u32 4, %s25
        %p355 = scmp.lt.s32.totalorder %s354, 3
        %s356 = scalar_select %p355, %s354, 3
        %s357 = smul.addr %s356, 4
        %s358 = scalar_lea.vmem %s0, %s357
        %s359 = smul.u32 4, %s25
        %s360 = smul.u32 4, %s25
        %p361 = scmp.lt.s32.totalorder %s360, 3
        %s362 = scalar_select %p361, %s360, 3
        %s363 = smul.addr %s362, 4
        %s364 = scalar_lea.vmem %s1, %s363
        %s365 = smul.u32 4, %s25
        %s366 = smul.u32 16, %s24
        %s367 = smul.u32 4, %s25
        %p368 = scmp.lt.s32.totalorder %s366, 31
        %s369 = scalar_select %p368, %s366, 31
        %p370 = scmp.lt.s32.totalorder %s367, 3
        %s371 = scalar_select %p370, %s367, 3
        %s372 = smul.addr %s369, 4
        %s373 = sadd.s32 %s371, %s372
        %s374 = smul.addr %s373, 4
        %s375 = scalar_lea.vmem %s2, %s374
        %s376 = smul.u32 16, %s24
        %s377 = smul.u32 4, %s25
        %s378 = smul.u32 16, %s24
        %s379 = smul.u32 4, %s25
        %p380 = scmp.lt.s32.totalorder %s378, 31
        %s381 = scalar_select %p380, %s378, 31
        %p382 = scmp.lt.s32.totalorder %s379, 3
        %s383 = scalar_select %p382, %s379, 3
        %s384 = smul.addr %s381, 4
        %s385 = sadd.s32 %s383, %s384
        %s386 = smul.addr %s385, 4
        %s387 = scalar_lea.vmem %s3, %s386
        %s388 = smul.u32 16, %s24
        %s389 = smul.u32 4, %s25
        %p390 = scmp.lt.s32.totalorder %s24, 1
        %s391 = scalar_select %p390, %s24, 1
        %s392 = scalar_lea.vmem %s4, %s391
        %p393 = scmp.lt.s32.totalorder %s24, 1
        %s394 = scalar_select %p393, %s24, 1
        %s395 = scalar_lea.vmem %s5, %s394
        %p397 = scmp.eq.s32.totalorder %s25, 0
        // Predicated region
        $region45: #{noisy_linear_forward.1} parent=43 // pred_check
          %p398 = pneg %p397
        $region46: #{noisy_linear_forward.1} parent=43 // pred_check_branch
          %400 = sbr.rel (%p398) target = $region48
        $region47: #{noisy_linear_forward.1} parent=43 // pred_region
          %401 = vst [vmem:[#allocation2] sm:$0xff] 0.0
        $region48: #{noisy_linear_forward.1} parent=43 // pred_fallthru
          _
        %v402 = vld [vmem:[%s358] sm:$0xff]
        %v403 = vld [vmem:[%s358 + $0x8] sm:$0xff]
        %v404 = vld [vmem:[%s375] sm:$0xff]
        %v405 = vld [vmem:[%s375 + $0x8] sm:$0xff]
        %v406 = vld [vmem:[%s375 + $0x10] sm:$0xff]
        %v407 = vld [vmem:[%s375 + $0x18] sm:$0xff]
        %v408 = vld [vmem:[%s375 + $0x20] sm:$0xff]
        %v409 = vld [vmem:[%s375 + $0x28] sm:$0xff]
        %v410 = vld [vmem:[%s375 + $0x30] sm:$0xff]
        %v411 = vld [vmem:[%s375 + $0x38] sm:$0xff]
        %v412 = vld [vmem:[%s375 + $0x40] sm:$0xff]
        %v413 = vld [vmem:[%s375 + $0x48] sm:$0xff]
        %v414 = vld [vmem:[%s375 + $0x50] sm:$0xff]
        %v415 = vld [vmem:[%s375 + $0x58] sm:$0xff]
        %v416 = vld [vmem:[%s375 + $0x60] sm:$0xff]
        %v417 = vld [vmem:[%s375 + $0x68] sm:$0xff]
        %v418 = vld [vmem:[%s375 + $0x70] sm:$0xff]
        %v419 = vld [vmem:[%s375 + $0x78] sm:$0xff]
        %v420 = vld [vmem:[%s375 + $0x80] sm:$0xff]
        %v421 = vld [vmem:[%s375 + $0x88] sm:$0xff]
        %v422 = vld [vmem:[%s375 + $0x90] sm:$0xff]
        %v423 = vld [vmem:[%s375 + $0x98] sm:$0xff]
        %v424 = vld [vmem:[%s375 + $0xa0] sm:$0xff]
        %v425 = vld [vmem:[%s375 + $0xa8] sm:$0xff]
        %v426 = vld [vmem:[%s375 + $0xb0] sm:$0xff]
        %v427 = vld [vmem:[%s375 + $0xb8] sm:$0xff]
        %v428 = vld [vmem:[%s375 + $0xc0] sm:$0xff]
        %v429 = vld [vmem:[%s375 + $0xc8] sm:$0xff]
        %v430 = vld [vmem:[%s375 + $0xd0] sm:$0xff]
        %v431 = vld [vmem:[%s375 + $0xd8] sm:$0xff]
        %v432 = vld [vmem:[%s375 + $0xe0] sm:$0xff]
        %v433 = vld [vmem:[%s375 + $0xe8] sm:$0xff]
        %v434 = vld [vmem:[%s375 + $0xf0] sm:$0xff]
        %v435 = vld [vmem:[%s375 + $0xf8] sm:$0xff]
        %v436 = vld [vmem:[%s364] sm:$0xff]
        %v437 = vld [vmem:[%s364 + $0x8] sm:$0xff]
        %v438 = vld [vmem:[%s387] sm:$0xff]
        %v439 = vld [vmem:[%s387 + $0x8] sm:$0xff]
        %v440 = vld [vmem:[%s387 + $0x10] sm:$0xff]
        %v441 = vld [vmem:[%s387 + $0x18] sm:$0xff]
        %v442 = vld [vmem:[%s387 + $0x20] sm:$0xff]
        %v443 = vld [vmem:[%s387 + $0x28] sm:$0xff]
        %v444 = vld [vmem:[%s387 + $0x30] sm:$0xff]
        %v445 = vld [vmem:[%s387 + $0x38] sm:$0xff]
        %v446 = vld [vmem:[%s387 + $0x40] sm:$0xff]
        %v447 = vld [vmem:[%s387 + $0x48] sm:$0xff]
        %v448 = vld [vmem:[%s387 + $0x50] sm:$0xff]
        %v449 = vld [vmem:[%s387 + $0x58] sm:$0xff]
        %v450 = vld [vmem:[%s387 + $0x60] sm:$0xff]
        %v451 = vld [vmem:[%s387 + $0x68] sm:$0xff]
        %v452 = vld [vmem:[%s387 + $0x70] sm:$0xff]
        %v453 = vld [vmem:[%s387 + $0x78] sm:$0xff]
        %v454 = vld [vmem:[%s387 + $0x80] sm:$0xff]
        %v455 = vld [vmem:[%s387 + $0x88] sm:$0xff]
        %v456 = vld [vmem:[%s387 + $0x90] sm:$0xff]
        %v457 = vld [vmem:[%s387 + $0x98] sm:$0xff]
        %v458 = vld [vmem:[%s387 + $0xa0] sm:$0xff]
        %v459 = vld [vmem:[%s387 + $0xa8] sm:$0xff]
        %v460 = vld [vmem:[%s387 + $0xb0] sm:$0xff]
        %v461 = vld [vmem:[%s387 + $0xb8] sm:$0xff]
        %v462 = vld [vmem:[%s387 + $0xc0] sm:$0xff]
        %v463 = vld [vmem:[%s387 + $0xc8] sm:$0xff]
        %v464 = vld [vmem:[%s387 + $0xd0] sm:$0xff]
        %v465 = vld [vmem:[%s387 + $0xd8] sm:$0xff]
        %v466 = vld [vmem:[%s387 + $0xe0] sm:$0xff]
        %v467 = vld [vmem:[%s387 + $0xe8] sm:$0xff]
        %v468 = vld [vmem:[%s387 + $0xf0] sm:$0xff]
        %v469 = vld [vmem:[%s387 + $0xf8] sm:$0xff]
        %v472 = vunpack.c.l.b16 %v436
        %v473 = vunpack.c.h.b16 %v436
        %v474 = vunpack.c.l.b16 %v437
        %v475 = vunpack.c.h.b16 %v437
        %v476 = vpack.c.b16 %v472, %v472
        %v477 = vpack.c.b16 %v473, %v473
        %v478 = vpack.c.b16 %v474, %v474
        %v479 = vpack.c.b16 %v475, %v475
        %v516 = vunpack.c.l.b16 %v438
        %v517 = vunpack.c.h.b16 %v438
        %v518 = vunpack.c.l.b16 %v439
        %v519 = vunpack.c.h.b16 %v439
        %v520 = vunpack.c.l.b16 %v440
        %v521 = vunpack.c.h.b16 %v440
        %v522 = vunpack.c.l.b16 %v441
        %v523 = vunpack.c.h.b16 %v441
        %v524 = vunpack.c.l.b16 %v442
        %v525 = vunpack.c.h.b16 %v442
        %v526 = vunpack.c.l.b16 %v443
        %v527 = vunpack.c.h.b16 %v443
        %v528 = vunpack.c.l.b16 %v444
        %v529 = vunpack.c.h.b16 %v444
        %v530 = vunpack.c.l.b16 %v445
        %v531 = vunpack.c.h.b16 %v445
        %v532 = vunpack.c.l.b16 %v446
        %v533 = vunpack.c.h.b16 %v446
        %v534 = vunpack.c.l.b16 %v447
        %v535 = vunpack.c.h.b16 %v447
        %v536 = vunpack.c.l.b16 %v448
        %v537 = vunpack.c.h.b16 %v448
        %v538 = vunpack.c.l.b16 %v449
        %v539 = vunpack.c.h.b16 %v449
        %v540 = vunpack.c.l.b16 %v450
        %v541 = vunpack.c.h.b16 %v450
        %v542 = vunpack.c.l.b16 %v451
        %v543 = vunpack.c.h.b16 %v451
        %v544 = vunpack.c.l.b16 %v452
        %v545 = vunpack.c.h.b16 %v452
        %v546 = vunpack.c.l.b16 %v453
        %v547 = vunpack.c.h.b16 %v453
        %v548 = vunpack.c.l.b16 %v454
        %v549 = vunpack.c.h.b16 %v454
        %v550 = vunpack.c.l.b16 %v455
        %v551 = vunpack.c.h.b16 %v455
        %v552 = vunpack.c.l.b16 %v456
        %v553 = vunpack.c.h.b16 %v456
        %v554 = vunpack.c.l.b16 %v457
        %v555 = vunpack.c.h.b16 %v457
        %v556 = vunpack.c.l.b16 %v458
        %v557 = vunpack.c.h.b16 %v458
        %v558 = vunpack.c.l.b16 %v459
        %v559 = vunpack.c.h.b16 %v459
        %v560 = vunpack.c.l.b16 %v460
        %v561 = vunpack.c.h.b16 %v460
        %v562 = vunpack.c.l.b16 %v461
        %v563 = vunpack.c.h.b16 %v461
        %v564 = vunpack.c.l.b16 %v462
        %v565 = vunpack.c.h.b16 %v462
        %v566 = vunpack.c.l.b16 %v463
        %v567 = vunpack.c.h.b16 %v463
        %v568 = vunpack.c.l.b16 %v464
        %v569 = vunpack.c.h.b16 %v464
        %v570 = vunpack.c.l.b16 %v465
        %v571 = vunpack.c.h.b16 %v465
        %v572 = vunpack.c.l.b16 %v466
        %v573 = vunpack.c.h.b16 %v466
        %v574 = vunpack.c.l.b16 %v467
        %v575 = vunpack.c.h.b16 %v467
        %v576 = vunpack.c.l.b16 %v468
        %v577 = vunpack.c.h.b16 %v468
        %v578 = vunpack.c.l.b16 %v469
        %v579 = vunpack.c.h.b16 %v469
        %v580 = vpack.c.b16 %v520, %v516
        %v581 = vpack.c.b16 %v521, %v517
        %v582 = vpack.c.b16 %v522, %v518
        %v583 = vpack.c.b16 %v523, %v519
        %v584 = vpack.c.b16 %v528, %v524
        %v585 = vpack.c.b16 %v529, %v525
        %v586 = vpack.c.b16 %v530, %v526
        %v587 = vpack.c.b16 %v531, %v527
        %v588 = vpack.c.b16 %v536, %v532
        %v589 = vpack.c.b16 %v537, %v533
        %v590 = vpack.c.b16 %v538, %v534
        %v591 = vpack.c.b16 %v539, %v535
        %v592 = vpack.c.b16 %v544, %v540
        %v593 = vpack.c.b16 %v545, %v541
        %v594 = vpack.c.b16 %v546, %v542
        %v595 = vpack.c.b16 %v547, %v543
        %v596 = vpack.c.b16 %v552, %v548
        %v597 = vpack.c.b16 %v553, %v549
        %v598 = vpack.c.b16 %v554, %v550
        %v599 = vpack.c.b16 %v555, %v551
        %v600 = vpack.c.b16 %v560, %v556
        %v601 = vpack.c.b16 %v561, %v557
        %v602 = vpack.c.b16 %v562, %v558
        %v603 = vpack.c.b16 %v563, %v559
        %v604 = vpack.c.b16 %v568, %v564
        %v605 = vpack.c.b16 %v569, %v565
        %v606 = vpack.c.b16 %v570, %v566
        %v607 = vpack.c.b16 %v571, %v567
        %v608 = vpack.c.b16 %v576, %v572
        %v609 = vpack.c.b16 %v577, %v573
        %v610 = vpack.c.b16 %v578, %v574
        %v611 = vpack.c.b16 %v579, %v575
        %644 = vmatprep.subr.bf16.mxu0 %v609
        %645 = vmatpush1.bf16.xpose.msra.mxu0 %v608
        %646 = vmatprep.subr.bf16.mxu0 %v605
        %647 = vmatpush1.bf16.xpose.msra.mxu0 %v604
        %648 = vmatprep.subr.bf16.mxu0 %v601
        %649 = vmatpush1.bf16.xpose.msra.mxu0 %v600
        %650 = vmatprep.subr.bf16.mxu0 %v597
        %651 = vmatpush1.bf16.xpose.msra.mxu0 %v596
        %652 = vmatprep.subr.bf16.mxu0 %v593
        %653 = vmatpush1.bf16.xpose.msra.mxu0 %v592
        %654 = vmatprep.subr.bf16.mxu0 %v589
        %655 = vmatpush1.bf16.xpose.msra.mxu0 %v588
        %656 = vmatprep.subr.bf16.mxu0 %v585
        %657 = vmatpush1.bf16.xpose.msra.mxu0 %v584
        %658 = vmatprep.subr.bf16.mxu0 %v581
        %659 = vmatpush1.bf16.xpose.msra.mxu0 %v580
        %660 = vmatprep.subr.bf16.mxu0 0
        %661 = vmatpush2.bf16.xpose.msra.mxu0 0
        %662 = vmatprep.subr.bf16.mxu0 0
        %663 = vmatpush2.bf16.xpose.msra.mxu0 0
        %664 = vmatprep.subr.bf16.mxu0 0
        %665 = vmatpush2.bf16.xpose.msra.mxu0 0
        %666 = vmatprep.subr.bf16.mxu0 0
        %667 = vmatpush2.bf16.xpose.msra.mxu0 0
        %668 = vmatprep.subr.bf16.mxu0 0
        %669 = vmatpush2.bf16.xpose.msra.mxu0 0
        %670 = vmatprep.subr.bf16.mxu0 0
        %671 = vmatpush2.bf16.xpose.msra.mxu0 0
        %672 = vmatprep.subr.bf16.mxu0 0
        %673 = vmatpush2.bf16.xpose.msra.mxu0 0
        %674 = vmatprep.subr.bf16.mxu0 0
        %675 = vmatpush2.bf16.xpose.msra.mxu0 0
        %676 = vmatprep.mubr.bf16.mxu0 %v477
        %677 = vmatmul.mubr.bf16.gmra.mxu0 %v476
        %v678 = vpop.f32.mrf.mxu0
        %v679 = vadd.f32 0.0, %v678
        %v680 = vpop.f32.mrf.mxu0
        %v681 = vpop.f32.mrf.mxu0
        %v682 = vpop.f32.mrf.mxu0
        %683 = vdwg.mxu0
        %684 = vmatprep.subr.bf16.mxu0 %v611
        %685 = vmatpush1.bf16.xpose.msra.mxu0 %v610
        %686 = vmatprep.subr.bf16.mxu0 %v607
        %687 = vmatpush1.bf16.xpose.msra.mxu0 %v606
        %688 = vmatprep.subr.bf16.mxu0 %v603
        %689 = vmatpush1.bf16.xpose.msra.mxu0 %v602
        %690 = vmatprep.subr.bf16.mxu0 %v599
        %691 = vmatpush1.bf16.xpose.msra.mxu0 %v598
        %692 = vmatprep.subr.bf16.mxu0 %v595
        %693 = vmatpush1.bf16.xpose.msra.mxu0 %v594
        %694 = vmatprep.subr.bf16.mxu0 %v591
        %695 = vmatpush1.bf16.xpose.msra.mxu0 %v590
        %696 = vmatprep.subr.bf16.mxu0 %v587
        %697 = vmatpush1.bf16.xpose.msra.mxu0 %v586
        %698 = vmatprep.subr.bf16.mxu0 %v583
        %699 = vmatpush1.bf16.xpose.msra.mxu0 %v582
        %700 = vmatprep.subr.bf16.mxu0 0
        %701 = vmatpush2.bf16.xpose.msra.mxu0 0
        %702 = vmatprep.subr.bf16.mxu0 0
        %703 = vmatpush2.bf16.xpose.msra.mxu0 0
        %704 = vmatprep.subr.bf16.mxu0 0
        %705 = vmatpush2.bf16.xpose.msra.mxu0 0
        %706 = vmatprep.subr.bf16.mxu0 0
        %707 = vmatpush2.bf16.xpose.msra.mxu0 0
        %708 = vmatprep.subr.bf16.mxu0 0
        %709 = vmatpush2.bf16.xpose.msra.mxu0 0
        %710 = vmatprep.subr.bf16.mxu0 0
        %711 = vmatpush2.bf16.xpose.msra.mxu0 0
        %712 = vmatprep.subr.bf16.mxu0 0
        %713 = vmatpush2.bf16.xpose.msra.mxu0 0
        %714 = vmatprep.subr.bf16.mxu0 0
        %715 = vmatpush2.bf16.xpose.msra.mxu0 0
        %716 = vmatprep.mubr.bf16.mxu0 %v479
        %717 = vmatmul.mubr.bf16.gmra.mxu0 %v478
        %v718 = vpop.f32.mrf.mxu0
        %v719 = vadd.f32 %v679, %v718
        %v720 = vpop.f32.mrf.mxu0
        %v721 = vpop.f32.mrf.mxu0
        %v722 = vpop.f32.mrf.mxu0
        %723 = vdwg.mxu0
        %v724 = vld [vmem:[#allocation2] sm:$0xff]
        %v725 = vld [vmem:[%s392] sm:$0x1]
        %v727 = vlaneseq
        %v728 = vshrl.u32 %v727, 7
        %v729 = vsub.s32 0, %v728
        %v730 = vrot.slane %v725, %v729
        %v732 = vmul.f32 %v730, %v719
        %v735 = vunpack.c.l.b16 %v402
        %v736 = vunpack.c.h.b16 %v402
        %v737 = vunpack.c.l.b16 %v403
        %v738 = vunpack.c.h.b16 %v403
        %v739 = vpack.c.b16 %v735, %v735
        %v740 = vpack.c.b16 %v736, %v736
        %v741 = vpack.c.b16 %v737, %v737
        %v742 = vpack.c.b16 %v738, %v738
        %v779 = vunpack.c.l.b16 %v404
        %v780 = vunpack.c.h.b16 %v404
        %v781 = vunpack.c.l.b16 %v405
        %v782 = vunpack.c.h.b16 %v405
        %v783 = vunpack.c.l.b16 %v406
        %v784 = vunpack.c.h.b16 %v406
        %v785 = vunpack.c.l.b16 %v407
        %v786 = vunpack.c.h.b16 %v407
        %v787 = vunpack.c.l.b16 %v408
        %v788 = vunpack.c.h.b16 %v408
        %v789 = vunpack.c.l.b16 %v409
        %v790 = vunpack.c.h.b16 %v409
        %v791 = vunpack.c.l.b16 %v410
        %v792 = vunpack.c.h.b16 %v410
        %v793 = vunpack.c.l.b16 %v411
        %v794 = vunpack.c.h.b16 %v411
        %v795 = vunpack.c.l.b16 %v412
        %v796 = vunpack.c.h.b16 %v412
        %v797 = vunpack.c.l.b16 %v413
        %v798 = vunpack.c.h.b16 %v413
        %v799 = vunpack.c.l.b16 %v414
        %v800 = vunpack.c.h.b16 %v414
        %v801 = vunpack.c.l.b16 %v415
        %v802 = vunpack.c.h.b16 %v415
        %v803 = vunpack.c.l.b16 %v416
        %v804 = vunpack.c.h.b16 %v416
        %v805 = vunpack.c.l.b16 %v417
        %v806 = vunpack.c.h.b16 %v417
        %v807 = vunpack.c.l.b16 %v418
        %v808 = vunpack.c.h.b16 %v418
        %v809 = vunpack.c.l.b16 %v419
        %v810 = vunpack.c.h.b16 %v419
        %v811 = vunpack.c.l.b16 %v420
        %v812 = vunpack.c.h.b16 %v420
        %v813 = vunpack.c.l.b16 %v421
        %v814 = vunpack.c.h.b16 %v421
        %v815 = vunpack.c.l.b16 %v422
        %v816 = vunpack.c.h.b16 %v422
        %v817 = vunpack.c.l.b16 %v423
        %v818 = vunpack.c.h.b16 %v423
        %v819 = vunpack.c.l.b16 %v424
        %v820 = vunpack.c.h.b16 %v424
        %v821 = vunpack.c.l.b16 %v425
        %v822 = vunpack.c.h.b16 %v425
        %v823 = vunpack.c.l.b16 %v426
        %v824 = vunpack.c.h.b16 %v426
        %v825 = vunpack.c.l.b16 %v427
        %v826 = vunpack.c.h.b16 %v427
        %v827 = vunpack.c.l.b16 %v428
        %v828 = vunpack.c.h.b16 %v428
        %v829 = vunpack.c.l.b16 %v429
        %v830 = vunpack.c.h.b16 %v429
        %v831 = vunpack.c.l.b16 %v430
        %v832 = vunpack.c.h.b16 %v430
        %v833 = vunpack.c.l.b16 %v431
        %v834 = vunpack.c.h.b16 %v431
        %v835 = vunpack.c.l.b16 %v432
        %v836 = vunpack.c.h.b16 %v432
        %v837 = vunpack.c.l.b16 %v433
        %v838 = vunpack.c.h.b16 %v433
        %v839 = vunpack.c.l.b16 %v434
        %v840 = vunpack.c.h.b16 %v434
        %v841 = vunpack.c.l.b16 %v435
        %v842 = vunpack.c.h.b16 %v435
        %v843 = vpack.c.b16 %v783, %v779
        %v844 = vpack.c.b16 %v784, %v780
        %v845 = vpack.c.b16 %v785, %v781
        %v846 = vpack.c.b16 %v786, %v782
        %v847 = vpack.c.b16 %v791, %v787
        %v848 = vpack.c.b16 %v792, %v788
        %v849 = vpack.c.b16 %v793, %v789
        %v850 = vpack.c.b16 %v794, %v790
        %v851 = vpack.c.b16 %v799, %v795
        %v852 = vpack.c.b16 %v800, %v796
        %v853 = vpack.c.b16 %v801, %v797
        %v854 = vpack.c.b16 %v802, %v798
        %v855 = vpack.c.b16 %v807, %v803
        %v856 = vpack.c.b16 %v808, %v804
        %v857 = vpack.c.b16 %v809, %v805
        %v858 = vpack.c.b16 %v810, %v806
        %v859 = vpack.c.b16 %v815, %v811
        %v860 = vpack.c.b16 %v816, %v812
        %v861 = vpack.c.b16 %v817, %v813
        %v862 = vpack.c.b16 %v818, %v814
        %v863 = vpack.c.b16 %v823, %v819
        %v864 = vpack.c.b16 %v824, %v820
        %v865 = vpack.c.b16 %v825, %v821
        %v866 = vpack.c.b16 %v826, %v822
        %v867 = vpack.c.b16 %v831, %v827
        %v868 = vpack.c.b16 %v832, %v828
        %v869 = vpack.c.b16 %v833, %v829
        %v870 = vpack.c.b16 %v834, %v830
        %v871 = vpack.c.b16 %v839, %v835
        %v872 = vpack.c.b16 %v840, %v836
        %v873 = vpack.c.b16 %v841, %v837
        %v874 = vpack.c.b16 %v842, %v838
        %907 = vmatprep.subr.bf16.mxu0 %v872
        %908 = vmatpush1.bf16.xpose.msra.mxu0 %v871
        %909 = vmatprep.subr.bf16.mxu0 %v868
        %910 = vmatpush1.bf16.xpose.msra.mxu0 %v867
        %911 = vmatprep.subr.bf16.mxu0 %v864
        %912 = vmatpush1.bf16.xpose.msra.mxu0 %v863
        %913 = vmatprep.subr.bf16.mxu0 %v860
        %914 = vmatpush1.bf16.xpose.msra.mxu0 %v859
        %915 = vmatprep.subr.bf16.mxu0 %v856
        %916 = vmatpush1.bf16.xpose.msra.mxu0 %v855
        %917 = vmatprep.subr.bf16.mxu0 %v852
        %918 = vmatpush1.bf16.xpose.msra.mxu0 %v851
        %919 = vmatprep.subr.bf16.mxu0 %v848
        %920 = vmatpush1.bf16.xpose.msra.mxu0 %v847
        %921 = vmatprep.subr.bf16.mxu0 %v844
        %922 = vmatpush1.bf16.xpose.msra.mxu0 %v843
        %923 = vmatprep.subr.bf16.mxu0 0
        %924 = vmatpush2.bf16.xpose.msra.mxu0 0
        %925 = vmatprep.subr.bf16.mxu0 0
        %926 = vmatpush2.bf16.xpose.msra.mxu0 0
        %927 = vmatprep.subr.bf16.mxu0 0
        %928 = vmatpush2.bf16.xpose.msra.mxu0 0
        %929 = vmatprep.subr.bf16.mxu0 0
        %930 = vmatpush2.bf16.xpose.msra.mxu0 0
        %931 = vmatprep.subr.bf16.mxu0 0
        %932 = vmatpush2.bf16.xpose.msra.mxu0 0
        %933 = vmatprep.subr.bf16.mxu0 0
        %934 = vmatpush2.bf16.xpose.msra.mxu0 0
        %935 = vmatprep.subr.bf16.mxu0 0
        %936 = vmatpush2.bf16.xpose.msra.mxu0 0
        %937 = vmatprep.subr.bf16.mxu0 0
        %938 = vmatpush2.bf16.xpose.msra.mxu0 0
        %939 = vmatprep.mubr.bf16.mxu0 %v740
        %940 = vmatmul.mubr.bf16.gmra.mxu0 %v739
        %v941 = vpop.f32.mrf.mxu0
        %v942 = vadd.f32 %v732, %v941
        %v943 = vpop.f32.mrf.mxu0
        %v944 = vpop.f32.mrf.mxu0
        %v945 = vpop.f32.mrf.mxu0
        %946 = vdwg.mxu0
        %947 = vmatprep.subr.bf16.mxu0 %v874
        %948 = vmatpush1.bf16.xpose.msra.mxu0 %v873
        %949 = vmatprep.subr.bf16.mxu0 %v870
        %950 = vmatpush1.bf16.xpose.msra.mxu0 %v869
        %951 = vmatprep.subr.bf16.mxu0 %v866
        %952 = vmatpush1.bf16.xpose.msra.mxu0 %v865
        %953 = vmatprep.subr.bf16.mxu0 %v862
        %954 = vmatpush1.bf16.xpose.msra.mxu0 %v861
        %955 = vmatprep.subr.bf16.mxu0 %v858
        %956 = vmatpush1.bf16.xpose.msra.mxu0 %v857
        %957 = vmatprep.subr.bf16.mxu0 %v854
        %958 = vmatpush1.bf16.xpose.msra.mxu0 %v853
        %959 = vmatprep.subr.bf16.mxu0 %v850
        %960 = vmatpush1.bf16.xpose.msra.mxu0 %v849
        %961 = vmatprep.subr.bf16.mxu0 %v846
        %962 = vmatpush1.bf16.xpose.msra.mxu0 %v845
        %963 = vmatprep.subr.bf16.mxu0 0
        %964 = vmatpush2.bf16.xpose.msra.mxu0 0
        %965 = vmatprep.subr.bf16.mxu0 0
        %966 = vmatpush2.bf16.xpose.msra.mxu0 0
        %967 = vmatprep.subr.bf16.mxu0 0
        %968 = vmatpush2.bf16.xpose.msra.mxu0 0
        %969 = vmatprep.subr.bf16.mxu0 0
        %970 = vmatpush2.bf16.xpose.msra.mxu0 0
        %971 = vmatprep.subr.bf16.mxu0 0
        %972 = vmatpush2.bf16.xpose.msra.mxu0 0
        %973 = vmatprep.subr.bf16.mxu0 0
        %974 = vmatpush2.bf16.xpose.msra.mxu0 0
        %975 = vmatprep.subr.bf16.mxu0 0
        %976 = vmatpush2.bf16.xpose.msra.mxu0 0
        %977 = vmatprep.subr.bf16.mxu0 0
        %978 = vmatpush2.bf16.xpose.msra.mxu0 0
        %979 = vmatprep.mubr.bf16.mxu0 %v742
        %980 = vmatmul.mubr.bf16.gmra.mxu0 %v741
        %v981 = vpop.f32.mrf.mxu0
        %v982 = vadd.f32 %v942, %v981
        %v983 = vpop.f32.mrf.mxu0
        %v984 = vpop.f32.mrf.mxu0
        %v985 = vpop.f32.mrf.mxu0
        %986 = vdwg.mxu0
        %v987 = vadd.f32 %v724, %v982
        %988 = vst [vmem:[#allocation2] sm:$0xff] %v987
        // Predicated region
        $region49: #{noisy_linear_forward.1} parent=43 // pred_check
          %p989 = pneg %p397
        $region50: #{noisy_linear_forward.1} parent=43 // pred_check_branch
          %991 = sbr.rel (%p989) target = $region52
        $region51: #{noisy_linear_forward.1} parent=43 // pred_region
          %v992 = vld [vmem:[#allocation2] sm:$0xff]
          %v993 = vld [vmem:[%s395] sm:$0x1]
          %v995 = vlaneseq
          %v996 = vshrl.u32 %v995, 7
          %v997 = vsub.s32 0, %v996
          %v998 = vrot.slane %v993, %v997
          %v1000 = vadd.f32 %v992, %v998
          %1001 = vst [vmem:[%s353] sm:$0xff] %v1000
        $region52: #{noisy_linear_forward.1} parent=43 // pred_fallthru
          _
        %s1002 = sand.u32 %s200, 1
        %s1003 = scalar_lea.sflag [#allocation4], %s1002
        %s1004 = sand.u32 %s200, 1
        %s1005 = smul.addr %s1004, 8
        %s1006 = scalar_lea.vmem [#allocation3], %s1005
        // Predicated region
        $region53: #{noisy_linear_forward.1} parent=43 // pred_check
          %p1007 = pneg %p210
        $region54: #{noisy_linear_forward.1} parent=43 // pred_check_branch
          %1009 = sbr.rel (%p1007) target = $region56
        $region55: #{noisy_linear_forward.1} parent=43 // pred_region
          %s1011 = ssub.s32 128, 128
          %1012 = vsyncadd %s1003, %s1011
          %s1013 = smul.addr %s24, 128
          %s1014 = scalar_lea.hbm %s6, %s1013
          %s1016 = sshll.u32 %s1006, 4
          %s1017 = int_to_ptr.vmem [resolvable:$true] %s1016
          %1019 = dma.vmem_to_hbm [thread:$0]  %s1017, 128, %s1014, %s1003
        $region56: #{noisy_linear_forward.1} parent=43 // pred_fallthru
          _
      $region44: #{noisy_linear_forward.1} parent=5 // pred_fallthru
        _
      %p1020 = scmp.le.s32.totalorder 2, %s15
      // Predicated region
      $region57: #{noisy_linear_forward.1} parent=5 // pred_check
        %p1021 = pneg %p1020
      $region58: #{noisy_linear_forward.1} parent=5 // pred_check_branch
        %1023 = sbr.rel (%p1021) target = $region60
      $region59: #{noisy_linear_forward.1} parent=5 // pred_region
        %s1024 = ssub.s32 %s15, 2
        // Predicated region
        $region61: #{noisy_linear_forward.1} parent=59 // pred_check
          %p1025 = pneg %p216
        $region62: #{noisy_linear_forward.1} parent=59 // pred_check_branch
          %1027 = sbr.rel (%p1025) target = $region64
        $region63: #{noisy_linear_forward.1} parent=59 // pred_region
          %s1028 = sand.u32 %s201, 1
          %s1029 = scalar_lea.sflag [#allocation4], %s1028
          %s1030 = sand.u32 %s201, 1
          %s1031 = smul.addr %s1030, 8
          %s1032 = scalar_lea.vmem [#allocation3], %s1031
          %1033 = dma.done %s1029, 128
        $region64: #{noisy_linear_forward.1} parent=59 // pred_fallthru
          _
      $region60: #{noisy_linear_forward.1} parent=5 // pred_fallthru
        _
    $region6: #{noisy_linear_forward.1} parent=1 // loop_footer
      %s19 = sadd.s32 1, %s15
    $region7: #{noisy_linear_forward.1} parent=1 // loop_footer_branch
      %14 = sbr.rel target = $region3
    $region8: #{noisy_linear_forward.1} parent=1 // loop_exit
      _
    %1034 = vsyncpa [#allocation4], 1
    %s1035 = scalar_lea.sflag [#allocation4], 1
    %1036 = vsyncpa %s1035, 1

</llo_original>
